<compile_context>
chip_gen: v5e
topology: v5e:2x2
jax: 0.10.0
libtpu: 0.0.40
codegen_flags: <defaults>
</compile_context>

<pallas_src>
import functools

import jax
import jax.numpy as jnp
from jax.experimental import pallas as pl
from jax.experimental.pallas import tpu as pltpu


_VMEM_TABLE_BYTES_LIMIT = 16 * 1024 * 1024  # fast-path threshold (fits v7x 64 MiB VMEM)
_MAX_INFLIGHT_DMAS = 16                     # rolling-wave depth for the HBM path


def _round_up(x, m):
    return ((x + m - 1) // m) * m


def _vmem_gather_kernel(ids_ref, table_ref, out_ref):
    """Row gather with the whole (padded) table resident in VMEM.

    ids_ref:   SMEM (S_pad,) int32      (scalar prefetch)
    table_ref: VMEM (V_pad, E_pad) f32  (full table; constant index_map -> fetched once)
    out_ref:   VMEM (R, E_pad) f32      (one output block per grid step)
    """
    i = pl.program_id(0)
    rows = out_ref.shape[0]                    # static block size R
    base = i * rows
    for r in range(rows):                      # static unroll; store index is static
        row = ids_ref[base + r]                # scalar id from SMEM
        out_ref[pl.ds(r, 1), :] = table_ref[pl.ds(row, 1), :]


def _hbm_gather_kernel(ids_ref, table_hbm, out_ref, sem):
    """Row gather with the table left in HBM (for tables too big for VMEM).

    ids_ref:   SMEM (S_pad,) int32         (scalar prefetch)
    table_hbm: ANY/HBM (V_pad, E_pad) f32  (never fully loaded)
    out_ref:   VMEM (R, E_pad) f32         (DMAs land directly here -- no slab)
    sem:       one shared DMA semaphore
    """
    i = pl.program_id(0)
    rows = out_ref.shape[0]                    # static block size R
    base = i * rows
    window = min(_MAX_INFLIGHT_DMAS, rows)     # bounded number of in-flight DMAs

    def issue(r):
        row = ids_ref[base + r]
        pltpu.make_async_copy(
            table_hbm.at[pl.ds(row, 1), :],    # one (1, E_pad) row from HBM
            out_ref.at[pl.ds(r, 1), :],        # straight into the output block
            sem,
        ).start()

    def retire_one():
        # Every row copy moves the same byte count, so waiting on the shared
        # semaphore for one row's worth retires exactly one in-flight DMA.
        pltpu.make_async_copy(
            table_hbm.at[pl.ds(0, 1), :],
            out_ref.at[pl.ds(0, 1), :],
            sem,
        ).wait()

    for r in range(window):                    # prime the wave (static, small)
        issue(r)

    @pl.loop(0, rows)                          # rolling wave: retire one, issue next
    def _(r):
        retire_one()

        @pl.when(r + window < rows)
        def _():
            issue(r + window)


@functools.partial(
    jax.jit, static_argnames=("embed_size", "rows_per_block", "force_hbm")
)
def embedding_lookup(table, ids, *, embed_size=None, rows_per_block=128,
                     force_hbm=False):
    """table (V, E) f32 (ideally pre-padded), ids (S,) int32 -> (S, embed_size) f32."""
    assert table.ndim == 2 and ids.ndim == 1
    V, E_in = table.shape
    S = ids.shape[0]
    E = E_in if embed_size is None else int(embed_size)

    if S == 0:
        return jnp.zeros((0, E), table.dtype)

    # Pad table to sublane/lane multiples.  The model pre-pads once in
    # __init__, so on the hot path this branch is skipped entirely.
    V_pad = _round_up(V, 8)
    E_pad = _round_up(E_in, 128)
    if (V_pad, E_pad) != (V, E_in):
        table = jnp.pad(table, ((0, V_pad - V), (0, E_pad - E_in)))

    # Rows per output block: big enough to amortize per-step overhead, but keep
    # >= 2 grid steps when the batch allows it (v7x: 2 TensorCores per chip).
    S8 = _round_up(S, 8)
    R = min(_round_up(rows_per_block, 8), S8)
    if S8 >= 16:
        R = min(R, _round_up(S8 // 2, 8))
    S_pad = _round_up(S, R)
    grid = (S_pad // R,)

    # Pad ids with 0 (a valid row); padded output rows are sliced off below.
    ids_p = jnp.pad(ids.astype(jnp.int32), (0, S_pad - S))

    itemsize = table.dtype.itemsize
    table_bytes = V_pad * E_pad * itemsize
    block_bytes = R * E_pad * itemsize
    out_shape = jax.ShapeDtypeStruct((S_pad, E_pad), table.dtype)
    out_spec = pl.BlockSpec((R, E_pad), lambda i, ids_ref: (i, 0))

    use_vmem_table = (not force_hbm) and table_bytes <= _VMEM_TABLE_BYTES_LIMIT

    if use_vmem_table:
        out_padded = pl.pallas_call(
            _vmem_gather_kernel,
            out_shape=out_shape,
            grid_spec=pltpu.PrefetchScalarGridSpec(
                num_scalar_prefetch=1,                  # ids -> SMEM
                grid=grid,
                in_specs=[
                    # Whole table VMEM-resident; constant index_map -> one fetch.
                    pl.BlockSpec((V_pad, E_pad), lambda i, ids_ref: (0, 0)),
                ],
                out_specs=out_spec,
            ),
            compiler_params=pltpu.CompilerParams(
                dimension_semantics=("parallel",),      # shard id-blocks across TCs
                vmem_limit_bytes=table_bytes + 4 * block_bytes + (8 << 20),
            ),
        )(ids_p, table)
    else:
        out_padded = pl.pallas_call(
            _hbm_gather_kernel,
            out_shape=out_shape,
            grid_spec=pltpu.PrefetchScalarGridSpec(
                num_scalar_prefetch=1,                  # ids -> SMEM
                grid=grid,
                in_specs=[
                    pl.BlockSpec(memory_space=pl.ANY),  # table stays in HBM
                ],
                out_specs=out_spec,
                scratch_shapes=[pltpu.SemaphoreType.DMA],   # one shared DMA sem
            ),
            compiler_params=pltpu.CompilerParams(
                dimension_semantics=("parallel",),
                vmem_limit_bytes=4 * block_bytes + (8 << 20),
            ),
        )(ids_p, table)

    return out_padded[:S, :E]


class EmbeddingModelPallas:
    """JAX/Pallas port of EmbeddingModel (forward pass only)."""

    def __init__(self, question_dict, embed_size=50, *, key=None):
        self.question_dict = dict(question_dict)
        self.num_tokens = int(max(self.question_dict.values()) + 1)
        self.embed_size = int(embed_size)
        self.hidden_dim = int(embed_size / 2)
        if key is None:
            key = jax.random.PRNGKey(0)
        # torch.nn.Embedding default init: weight ~ N(0, 1)
        self.embed_weight = jax.random.normal(
            key, (self.num_tokens, self.embed_size), dtype=jnp.float32
        )
        # Pre-pad ONCE (hoisted out of the per-call hot path).
        v_pad = _round_up(self.num_tokens, 8)
        e_pad = _round_up(self.embed_size, 128)
        self._table_padded = jnp.pad(
            self.embed_weight,
            ((0, v_pad - self.num_tokens), (0, e_pad - self.embed_size)),
        )

    def forward(self, sentences):
        # String -> id lookup stays in Python (matches the PyTorch module;
        # unknown sentence raises KeyError just like the torch dict lookup).
        ids_list = [self.question_dict[s] for s in sentences]
        # Host-side bounds check (torch.nn.Embedding raises on OOB ids; the
        # kernel would otherwise silently DMA/read an out-of-range row).
        assert all(0 <= i < self.num_tokens for i in ids_list), "id out of range"
        sentence_ids = jnp.asarray(ids_list, dtype=jnp.int32)
        return embedding_lookup(
            self._table_padded, sentence_ids, embed_size=self.embed_size
        )

    __call__ = forward


if __name__ == "__main__":
    # Small deterministic setup: 16 distinct "questions", embed_size=32.
    vocab = [f"question number {i}" for i in range(16)]
    question_dict = {s: i for i, s in enumerate(vocab)}

    model = EmbeddingModelPallas(
        question_dict, embed_size=32, key=jax.random.PRNGKey(0)
    )

    # Batch of 8 sentences (with repeats) to embed.
    batch = [vocab[i] for i in [3, 0, 7, 3, 15, 2, 9, 7]]

    out = jax.block_until_ready(model(batch))

    # Reference: plain JAX gather.
    ref_ids = jnp.asarray([question_dict[s] for s in batch], dtype=jnp.int32)
    ref = jnp.take(model.embed_weight, ref_ids, axis=0)

    assert out.shape == (len(batch), model.embed_size), out.shape
    assert out.dtype == jnp.float32
    assert jnp.array_equal(out, ref), "mismatch vs reference (VMEM path)"

    # Also exercise the HBM DMA-gather path (used for tables too large for VMEM).
    out_hbm = jax.block_until_ready(
        embedding_lookup(
            model._table_padded, ref_ids, embed_size=model.embed_size, force_hbm=True
        )
    )
    assert out_hbm.shape == (len(batch), model.embed_size)
    assert jnp.array_equal(out_hbm, ref), "mismatch vs reference (HBM path)"

    print("KERNEL_OK")
</pallas_src>

<mosaic_0001>
module attributes {stable_mosaic.version = 11 : i64} {
  func.func @_vmem_gather_kernel(%arg0: i32, %arg1: memref<8xi32, #tpu.memory_space<smem>>, %arg2: memref<16x128xf32, #tpu.memory_space<vmem>>, %arg3: memref<8x128xf32, #tpu.memory_space<vmem>>) attributes {dimension_semantics = [#tpu.dimension_semantics<parallel>], iteration_bounds = array<i64: 1>, scalar_prefetch = 1 : i64, scratch_operands = 0 : i64, tpu.core_type = #tpu.core_type<tc>, window_params = [{pipeline_mode = #tpu.pipeline_mode<synchronous>, transform_indices = @transform_0, window_bounds = array<i64: 16, 128>}, {transform_indices = @transform_1, window_bounds = array<i64: 8, 128>}]} {
    %c8_i32 = arith.constant 8 : i32
    %0 = arith.muli %arg0, %c8_i32 : i32
    %c0_i32 = arith.constant 0 : i32
    %1 = arith.addi %0, %c0_i32 : i32
    %2 = arith.index_cast %1 : i32 to index
    %3 = memref.load %arg1[%2] : memref<8xi32, #tpu.memory_space<smem>>
    %4 = arith.index_cast %3 : i32 to index
    %c0 = arith.constant 0 : index
    %5 = vector.load %arg2[%4, %c0] : memref<16x128xf32, #tpu.memory_space<vmem>>, vector<1x128xf32>
    %c0_0 = arith.constant 0 : index
    %c0_1 = arith.constant 0 : index
    %6 = vector.load %arg3[%c0_0, %c0_1] : memref<8x128xf32, #tpu.memory_space<vmem>>, vector<1x128xf32>
    tpu.vector_store %arg3[%c0_0, %c0_1], %5 {strides = array<i32>} : memref<8x128xf32, #tpu.memory_space<vmem>>, vector<1x128xf32>,
    %c1_i32 = arith.constant 1 : i32
    %7 = arith.addi %0, %c1_i32 : i32
    %8 = arith.index_cast %7 : i32 to index
    %9 = memref.load %arg1[%8] : memref<8xi32, #tpu.memory_space<smem>>
    %10 = arith.index_cast %9 : i32 to index
    %c0_2 = arith.constant 0 : index
    %11 = vector.load %arg2[%10, %c0_2] : memref<16x128xf32, #tpu.memory_space<vmem>>, vector<1x128xf32>
    %c1 = arith.constant 1 : index
    %c0_3 = arith.constant 0 : index
    %12 = vector.load %arg3[%c1, %c0_3] : memref<8x128xf32, #tpu.memory_space<vmem>>, vector<1x128xf32>
    tpu.vector_store %arg3[%c1, %c0_3], %11 {strides = array<i32>} : memref<8x128xf32, #tpu.memory_space<vmem>>, vector<1x128xf32>,
    %c2_i32 = arith.constant 2 : i32
    %13 = arith.addi %0, %c2_i32 : i32
    %14 = arith.index_cast %13 : i32 to index
    %15 = memref.load %arg1[%14] : memref<8xi32, #tpu.memory_space<smem>>
    %16 = arith.index_cast %15 : i32 to index
    %c0_4 = arith.constant 0 : index
    %17 = vector.load %arg2[%16, %c0_4] : memref<16x128xf32, #tpu.memory_space<vmem>>, vector<1x128xf32>
    %c2 = arith.constant 2 : index
    %c0_5 = arith.constant 0 : index
    %18 = vector.load %arg3[%c2, %c0_5] : memref<8x128xf32, #tpu.memory_space<vmem>>, vector<1x128xf32>
    tpu.vector_store %arg3[%c2, %c0_5], %17 {strides = array<i32>} : memref<8x128xf32, #tpu.memory_space<vmem>>, vector<1x128xf32>,
    %c3_i32 = arith.constant 3 : i32
    %19 = arith.addi %0, %c3_i32 : i32
    %20 = arith.index_cast %19 : i32 to index
    %21 = memref.load %arg1[%20] : memref<8xi32, #tpu.memory_space<smem>>
    %22 = arith.index_cast %21 : i32 to index
    %c0_6 = arith.constant 0 : index
    %23 = vector.load %arg2[%22, %c0_6] : memref<16x128xf32, #tpu.memory_space<vmem>>, vector<1x128xf32>
    %c3 = arith.constant 3 : index
    %c0_7 = arith.constant 0 : index
    %24 = vector.load %arg3[%c3, %c0_7] : memref<8x128xf32, #tpu.memory_space<vmem>>, vector<1x128xf32>
    tpu.vector_store %arg3[%c3, %c0_7], %23 {strides = array<i32>} : memref<8x128xf32, #tpu.memory_space<vmem>>, vector<1x128xf32>,
    %c4_i32 = arith.constant 4 : i32
    %25 = arith.addi %0, %c4_i32 : i32
    %26 = arith.index_cast %25 : i32 to index
    %27 = memref.load %arg1[%26] : memref<8xi32, #tpu.memory_space<smem>>
    %28 = arith.index_cast %27 : i32 to index
    %c0_8 = arith.constant 0 : index
    %29 = vector.load %arg2[%28, %c0_8] : memref<16x128xf32, #tpu.memory_space<vmem>>, vector<1x128xf32>
    %c4 = arith.constant 4 : index
    %c0_9 = arith.constant 0 : index
    %30 = vector.load %arg3[%c4, %c0_9] : memref<8x128xf32, #tpu.memory_space<vmem>>, vector<1x128xf32>
    tpu.vector_store %arg3[%c4, %c0_9], %29 {strides = array<i32>} : memref<8x128xf32, #tpu.memory_space<vmem>>, vector<1x128xf32>,
    %c5_i32 = arith.constant 5 : i32
    %31 = arith.addi %0, %c5_i32 : i32
    %32 = arith.index_cast %31 : i32 to index
    %33 = memref.load %arg1[%32] : memref<8xi32, #tpu.memory_space<smem>>
    %34 = arith.index_cast %33 : i32 to index
    %c0_10 = arith.constant 0 : index
    %35 = vector.load %arg2[%34, %c0_10] : memref<16x128xf32, #tpu.memory_space<vmem>>, vector<1x128xf32>
    %c5 = arith.constant 5 : index
    %c0_11 = arith.constant 0 : index
    %36 = vector.load %arg3[%c5, %c0_11] : memref<8x128xf32, #tpu.memory_space<vmem>>, vector<1x128xf32>
    tpu.vector_store %arg3[%c5, %c0_11], %35 {strides = array<i32>} : memref<8x128xf32, #tpu.memory_space<vmem>>, vector<1x128xf32>,
    %c6_i32 = arith.constant 6 : i32
    %37 = arith.addi %0, %c6_i32 : i32
    %38 = arith.index_cast %37 : i32 to index
    %39 = memref.load %arg1[%38] : memref<8xi32, #tpu.memory_space<smem>>
    %40 = arith.index_cast %39 : i32 to index
    %c0_12 = arith.constant 0 : index
    %41 = vector.load %arg2[%40, %c0_12] : memref<16x128xf32, #tpu.memory_space<vmem>>, vector<1x128xf32>
    %c6 = arith.constant 6 : index
    %c0_13 = arith.constant 0 : index
    %42 = vector.load %arg3[%c6, %c0_13] : memref<8x128xf32, #tpu.memory_space<vmem>>, vector<1x128xf32>
    tpu.vector_store %arg3[%c6, %c0_13], %41 {strides = array<i32>} : memref<8x128xf32, #tpu.memory_space<vmem>>, vector<1x128xf32>,
    %c7_i32 = arith.constant 7 : i32
    %43 = arith.addi %0, %c7_i32 : i32
    %44 = arith.index_cast %43 : i32 to index
    %45 = memref.load %arg1[%44] : memref<8xi32, #tpu.memory_space<smem>>
    %46 = arith.index_cast %45 : i32 to index
    %c0_14 = arith.constant 0 : index
    %47 = vector.load %arg2[%46, %c0_14] : memref<16x128xf32, #tpu.memory_space<vmem>>, vector<1x128xf32>
    %c7 = arith.constant 7 : index
    %c0_15 = arith.constant 0 : index
    %48 = vector.load %arg3[%c7, %c0_15] : memref<8x128xf32, #tpu.memory_space<vmem>>, vector<1x128xf32>
    tpu.vector_store %arg3[%c7, %c0_15], %47 {strides = array<i32>} : memref<8x128xf32, #tpu.memory_space<vmem>>, vector<1x128xf32>,
    return
  }
  func.func @transform_0(%arg0: i32, %arg1: memref<8xi32, #tpu.memory_space<smem>>) -> (i32, i32) {
    %c0_i32 = arith.constant 0 : i32
    %c0_i32_0 = arith.constant 0 : i32
    %c0_i32_1 = arith.constant 0 : i32
    return %c0_i32, %c0_i32_0 : i32, i32
  }
  func.func @transform_1(%arg0: i32, %arg1: memref<8xi32, #tpu.memory_space<smem>>) -> (i32, i32) {
    %c0_i32 = arith.constant 0 : i32
    %c0_i32_0 = arith.constant 0 : i32
    return %arg0, %c0_i32 : i32, i32
  }
}

</mosaic_0001>

<llo_original>
// kernel: embedding_lookup.1
$region0: #{embedding_lookup.1}
  #allocation0 [shape = 'u32[]', space=smem, size = 0x4, offset = 0x4, fixed_abs, tag = 'smem constant byte address 0x4 - core index']
  #allocation1 [shape = 'u32[72,128]{1,0:T(1,128)}', space=vmem, size = 0x9000, scoped, tag = 'internal scratch']
  #allocation2 [shape = 's32[1]{0}', space=sflag, size = 0x4, scoped, tag = 'scoped memory for embedding_lookup.1']
  #allocation3 [shape = 'u8[512]{0}', space=smem, size = 0x200, scoped, tag = 'prefetched SMEM operand 0']
  %s0 = inlined_call_operand.hbm [shape: s32[8], index: 0, kind: input, shape index: {}]
  %s1 = inlined_call_operand.hbm [shape: f32[16,128], index: 1, kind: input, shape index: {}]
  %s2 = inlined_call_operand.hbm [shape: f32[8,128], index: 2, kind: output, shape index: {}]
  %s3 = sld [smem:[#allocation0]]
  $region18: #{embedding_lookup.1} parent=0
    _
  %s5 = ssub.s32 1, %s3
  %s6 = scalar_select 0, %s5, %s3
  %s8 = sshll.u32 %s0, 4
  %s9 = int_to_ptr.hbm [resolvable:$true] %s8
  %11 = dma.hbm_to_smem %s9, 16, [#allocation3], [#allocation2]
  %13 = dma.done [#allocation2], 16
  %14 = sfence
  $region1: #{embedding_lookup.1} parent=0
    #allocation4 [shape = 'u8[8192]{0}', space=vmem, size = 0x2000, scoped, tag = 'input window, operand 1, single buffered']
    #allocation5 [shape = 's32[1]{0}', space=sflag, size = 0x4, scoped, tag = 'scoped memory for embedding_lookup.1']
    #allocation6 [shape = 's32[1]{0}', space=sflag, size = 0x4, scoped, tag = 'scoped memory for embedding_lookup.1']
    #allocation7 [shape = 'u8[4096]{0}', space=vmem, size = 0x1000, scoped, tag = 'output window, operand 0, single buffered']
    %15 = vsyncpa [#allocation5], 0
    %16 = vsyncpa [#allocation6], 0
    // Predicated region
    $region2: #{embedding_lookup.1} parent=1 // pred_check
      _
    $region3: #{embedding_lookup.1} parent=1 // pred_check_branch
      %18 = sbr.rel (0) target = $region5
    $region4: #{embedding_lookup.1} parent=1 // pred_region
      %20 = vsyncadd [#allocation5], 0
      %s21 = sshll.u32 %s1, 4
      %s22 = int_to_ptr.hbm [resolvable:$true] %s21
      %s23 = sshll.u32 [#allocation4], 4
      %s24 = int_to_ptr.vmem [resolvable:$true] %s23
      %29 = dma.hbm_to_vmem [thread:$0]  %s22, 256, %s24, [#allocation5], 128, 128, 8
    $region5: #{embedding_lookup.1} parent=1 // pred_fallthru
      _
    // Predicated region
    $region6: #{embedding_lookup.1} parent=1 // pred_check
      _
    $region7: #{embedding_lookup.1} parent=1 // pred_check_branch
      %31 = sbr.rel (0) target = $region9
    $region8: #{embedding_lookup.1} parent=1 // pred_region
      %33 = dma.done [#allocation5], 256
    $region9: #{embedding_lookup.1} parent=1 // pred_fallthru
      _
    %s34 = smul.u32 0, 8
    %s35 = sld [smem:[#allocation3 + %s34]]
    %s36 = scalar_lea.vmem [#allocation4], %s35
    %v37 = vld [vmem:[%s36] sm:$0x1]
    %38 = vst [vmem:[#allocation7] sm:$0x1] %v37
    %s39 = sadd.s32 %s34, 1
    %s40 = sld [smem:[#allocation3 + %s39]]
    %s41 = scalar_lea.vmem [#allocation4], %s40
    %v42 = vld [vmem:[%s41] sm:$0x1]
    %43 = vst [vmem:[#allocation7 + $0x1] sm:$0x1] %v42
    %s44 = sadd.s32 %s34, 2
    %s45 = sld [smem:[#allocation3 + %s44]]
    %s46 = scalar_lea.vmem [#allocation4], %s45
    %v47 = vld [vmem:[%s46] sm:$0x1]
    %48 = vst [vmem:[#allocation7 + $0x2] sm:$0x1] %v47
    %s49 = sadd.s32 %s34, 3
    %s50 = sld [smem:[#allocation3 + %s49]]
    %s51 = scalar_lea.vmem [#allocation4], %s50
    %v52 = vld [vmem:[%s51] sm:$0x1]
    %53 = vst [vmem:[#allocation7 + $0x3] sm:$0x1] %v52
    %s54 = sadd.s32 %s34, 4
    %s55 = sld [smem:[#allocation3 + %s54]]
    %s56 = scalar_lea.vmem [#allocation4], %s55
    %v57 = vld [vmem:[%s56] sm:$0x1]
    %58 = vst [vmem:[#allocation7 + $0x4] sm:$0x1] %v57
    %s59 = sadd.s32 %s34, 5
    %s60 = sld [smem:[#allocation3 + %s59]]
    %s61 = scalar_lea.vmem [#allocation4], %s60
    %v62 = vld [vmem:[%s61] sm:$0x1]
    %63 = vst [vmem:[#allocation7 + $0x5] sm:$0x1] %v62
    %s64 = sadd.s32 %s34, 6
    %s65 = sld [smem:[#allocation3 + %s64]]
    %s66 = scalar_lea.vmem [#allocation4], %s65
    %v67 = vld [vmem:[%s66] sm:$0x1]
    %68 = vst [vmem:[#allocation7 + $0x6] sm:$0x1] %v67
    %s69 = sadd.s32 %s34, 7
    %s70 = sld [smem:[#allocation3 + %s69]]
    %s71 = scalar_lea.vmem [#allocation4], %s70
    %v72 = vld [vmem:[%s71] sm:$0x1]
    %73 = vst [vmem:[#allocation7 + $0x7] sm:$0x1] %v72
    // Predicated region
    $region10: #{embedding_lookup.1} parent=1 // pred_check
      _
    $region11: #{embedding_lookup.1} parent=1 // pred_check_branch
      %75 = sbr.rel (0) target = $region13
    $region12: #{embedding_lookup.1} parent=1 // pred_region
      %77 = vsyncadd [#allocation6], 0
      %s79 = sshll.u32 [#allocation7], 4
      %s80 = int_to_ptr.vmem [resolvable:$true] %s79
      %s81 = sshll.u32 %s2, 4
      %s82 = int_to_ptr.hbm [resolvable:$true] %s81
      %84 = dma.vmem_to_hbm [thread:$0]  %s80, 128, %s82, [#allocation6]
    $region13: #{embedding_lookup.1} parent=1 // pred_fallthru
      _
    // Predicated region
    $region14: #{embedding_lookup.1} parent=1 // pred_check
      _
    $region15: #{embedding_lookup.1} parent=1 // pred_check_branch
      %86 = sbr.rel (0) target = $region17
    $region16: #{embedding_lookup.1} parent=1 // pred_region
      %88 = dma.done [#allocation6], 128
    $region17: #{embedding_lookup.1} parent=1 // pred_fallthru
      _
    %89 = vsyncpa [#allocation5], 1
    %90 = vsyncpa [#allocation6], 1

</llo_original>
